<compile_context>
chip_gen: v5e
topology: v5e:2x2
jax: 0.10.0
libtpu: 0.0.40
codegen_flags: <defaults>
</compile_context>

<pallas_src>
import math

import jax
import jax.numpy as jnp
from jax.experimental import pallas as pl
from jax.experimental.pallas import tpu as pltpu

STATE_SIZE = 5          # BoundingBox2DIndex.size()
OUT_W = 8               # packed output width: [x, y, heading, w, l, label, pad, pad]
VMEM_LIMIT_BYTES = 48 * 1024 * 1024   # > v5e's 16 MiB scoped default, < v7x physical 64 MiB
_ACT_TILE_BUDGET = 16 * 1024 * 1024   # budget for the double-buffered activation tiles


def _round_up(x, m):
    return (x + m - 1) // m * m


def _pick_tm(M, D, max_tm=512):
    """Pick the row tile: large (multiple of 128), VMEM-budgeted, not far past M."""
    tm = max(128, _round_up(min(max_tm, 512), 128))
    # shrink until double-buffered q + out tiles fit the activation budget
    while tm > 128 and 2 * tm * (D + OUT_W) * 4 > _ACT_TILE_BUDGET:
        tm //= 2
    # don't tile far beyond the (padded) problem size
    while tm > 128 and (tm // 2) >= _round_up(M, 128):
        tm //= 2
    # v7x has 2 TensorCores: prefer >= 2 parallel grid steps when the problem allows it
    if tm > 128 and pl.cdiv(M, tm) == 1 and M > 128:
        tm //= 2
    return tm


def agent_head_kernel(q_ref, w1_ref, b1_ref, w2_ref, b2_ref, scale_ref, out_ref):
    q = q_ref[...]                                                   # (tm, D)

    # Fused first projection: columns = [hidden(d_ffn) | +label | -label | zero pad]
    z = jnp.dot(q, w1_ref[...], preferred_element_type=jnp.float32) + b1_ref[...]
    h = jnp.maximum(z, 0.0)                                          # ReLU

    # Fused second projection: cols 0..4 = states, col 5 = relu(+l) - relu(-l) = raw label
    s = jnp.dot(h, w2_ref[...], preferred_element_type=jnp.float32) + b2_ref[...]

    # Post-process: cols 0,1 -> tanh*32 ; col 2 -> tanh*pi ; others identity.
    # Single select against a precomputed scale row; tanh runs on the EUP slot.
    col = jax.lax.broadcasted_iota(jnp.int32, s.shape, 1)
    out = jnp.where(col < 3, jnp.tanh(s) * scale_ref[...], s)
    out_ref[...] = out.astype(out_ref.dtype)


def _fuse_params(params):
    """Build fused / padded weights so one MXU pass per layer serves both heads."""
    w1, b1, w2, b2, wl, bl = params
    D, d_ffn = w1.shape
    F = _round_up(d_ffn + 2, 128)   # fused hidden width (MXU lane aligned)

    w1f = jnp.zeros((D, F), jnp.float32)
    w1f = w1f.at[:, :d_ffn].set(w1)
    w1f = w1f.at[:, d_ffn].set(wl[:, 0])          # +label branch
    w1f = w1f.at[:, d_ffn + 1].set(-wl[:, 0])     # -label branch

    b1f = jnp.zeros((1, F), jnp.float32)
    b1f = b1f.at[:, :d_ffn].set(b1)
    b1f = b1f.at[:, d_ffn].set(bl[:, 0])
    b1f = b1f.at[:, d_ffn + 1].set(-bl[:, 0])

    w2f = jnp.zeros((F, OUT_W), jnp.float32)
    w2f = w2f.at[:d_ffn, :STATE_SIZE].set(w2)
    w2f = w2f.at[d_ffn, STATE_SIZE].set(1.0)      # label = relu(+l) - relu(-l)
    w2f = w2f.at[d_ffn + 1, STATE_SIZE].set(-1.0)

    b2f = jnp.zeros((1, OUT_W), jnp.float32)
    b2f = b2f.at[:, :STATE_SIZE].set(b2)

    scale = jnp.array([[32.0, 32.0, math.pi] + [1.0] * (OUT_W - 3)], jnp.float32)
    return w1f, b1f, w2f, b2f, scale


def agent_head_forward(agent_queries, params, *, max_tm=512):
    """agent_queries: (batch, num_agents, d_model) float32."""
    B, A, D = agent_queries.shape
    M = B * A

    w1f, b1f, w2f, b2f, scale = _fuse_params(params)
    F = w1f.shape[1]

    tm = _pick_tm(M, D, max_tm)
    grid_m = pl.cdiv(M, tm)
    M_pad = grid_m * tm

    q2d = agent_queries.reshape(M, D)
    if M_pad != M:
        q2d = jnp.pad(q2d, ((0, M_pad - M), (0, 0)))   # pad rows are discarded later

    # NOTE: the weight/bias/scale operands have constant index_maps, so their
    # blocks are not re-fetched per grid step; with very large d_model/d_ffn
    # they could additionally be marked single-buffered (pl.Buffered(1)).
    out2d = pl.pallas_call(
        agent_head_kernel,
        out_shape=jax.ShapeDtypeStruct((M_pad, OUT_W), jnp.float32),
        grid_spec=pltpu.PrefetchScalarGridSpec(
            num_scalar_prefetch=0,
            grid=(grid_m,),
            in_specs=[
                pl.BlockSpec((tm, D), lambda i: (i, 0)),        # agent_queries tile
                pl.BlockSpec((D, F), lambda i: (0, 0)),         # fused w1 | +wl | -wl
                pl.BlockSpec((1, F), lambda i: (0, 0)),         # fused b1
                pl.BlockSpec((F, OUT_W), lambda i: (0, 0)),     # fused w2 | label passthrough
                pl.BlockSpec((1, OUT_W), lambda i: (0, 0)),     # fused b2
                pl.BlockSpec((1, OUT_W), lambda i: (0, 0)),     # post-process scale row
            ],
            out_specs=pl.BlockSpec((tm, OUT_W), lambda i: (i, 0)),
        ),
        compiler_params=pltpu.CompilerParams(
            dimension_semantics=("parallel",),
            vmem_limit_bytes=VMEM_LIMIT_BYTES,
        ),
    )(q2d, w1f, b1f, w2f, b2f, scale)

    out2d = out2d[:M]
    agent_states = out2d[:, :STATE_SIZE].reshape(B, A, STATE_SIZE)
    agent_labels = out2d[:, STATE_SIZE].reshape(B, A)   # == .squeeze(dim=-1)
    return {"agent_states": agent_states, "agent_labels": agent_labels}


def init_params(key, d_model, d_ffn):
    """Deterministic synthetic parameters (shapes match the nn.Module)."""
    k1, k2, k3, k4, k5, k6 = jax.random.split(key, 6)
    # Stored transposed relative to torch Linear.weight (we use x @ W + b).
    w1 = jax.random.normal(k1, (d_model, d_ffn), jnp.float32) * 0.05
    b1 = jax.random.normal(k2, (1, d_ffn), jnp.float32) * 0.05
    w2 = jax.random.normal(k3, (d_ffn, STATE_SIZE), jnp.float32) * 0.05
    b2 = jax.random.normal(k4, (1, STATE_SIZE), jnp.float32) * 0.05
    wl = jax.random.normal(k5, (d_model, 1), jnp.float32) * 0.05
    bl = jax.random.normal(k6, (1, 1), jnp.float32) * 0.05
    return (w1, b1, w2, b2, wl, bl)


def reference_forward(agent_queries, params):
    w1, b1, w2, b2, wl, bl = params
    h = jnp.maximum(agent_queries @ w1 + b1[0], 0.0)
    s = h @ w2 + b2[0]
    s = s.at[..., 0:2].set(jnp.tanh(s[..., 0:2]) * 32.0)
    s = s.at[..., 2].set(jnp.tanh(s[..., 2]) * jnp.float32(math.pi))
    lbl = (agent_queries @ wl + bl[0])[..., 0]
    return {"agent_states": s, "agent_labels": lbl}


if __name__ == "__main__":
    batch, num_agents, d_model, d_ffn = 2, 8, 32, 64

    key = jax.random.PRNGKey(0)
    kq, kp = jax.random.split(key)
    agent_queries = jax.random.normal(kq, (batch, num_agents, d_model), jnp.float32)
    params = init_params(kp, d_model, d_ffn)

    out = agent_head_forward(agent_queries, params)
    jax.block_until_ready(out)

    ref = reference_forward(agent_queries, params)
    assert out["agent_states"].shape == (batch, num_agents, STATE_SIZE)
    assert out["agent_labels"].shape == (batch, num_agents)
    assert jnp.allclose(out["agent_states"], ref["agent_states"], atol=1e-4), (
        float(jnp.max(jnp.abs(out["agent_states"] - ref["agent_states"]))))
    assert jnp.allclose(out["agent_labels"], ref["agent_labels"], atol=1e-4), (
        float(jnp.max(jnp.abs(out["agent_labels"] - ref["agent_labels"]))))

    # NaN check in the torch module is a debug print only; numerics are unaffected.
    print("KERNEL_OK")
</pallas_src>

<mosaic_0001>
module attributes {stable_mosaic.version = 11 : i64} {
  func.func @agent_head_kernel(%arg0: i32, %arg1: memref<128x32xf32, #tpu.memory_space<vmem>>, %arg2: memref<32x128xf32, #tpu.memory_space<vmem>>, %arg3: memref<1x128xf32, #tpu.memory_space<vmem>>, %arg4: memref<128x8xf32, #tpu.memory_space<vmem>>, %arg5: memref<1x8xf32, #tpu.memory_space<vmem>>, %arg6: memref<1x8xf32, #tpu.memory_space<vmem>>, %arg7: memref<128x8xf32, #tpu.memory_space<vmem>>) attributes {dimension_semantics = [#tpu.dimension_semantics<parallel>], iteration_bounds = array<i64: 1>, scalar_prefetch = 0 : i64, scratch_operands = 0 : i64, tpu.core_type = #tpu.core_type<tc>, window_params = [{transform_indices = @transform_0, window_bounds = array<i64: 128, 32>}, {pipeline_mode = #tpu.pipeline_mode<synchronous>, transform_indices = @transform_1, window_bounds = array<i64: 32, 128>}, {pipeline_mode = #tpu.pipeline_mode<synchronous>, transform_indices = @transform_2, window_bounds = array<i64: 1, 128>}, {pipeline_mode = #tpu.pipeline_mode<synchronous>, transform_indices = @transform_3, window_bounds = array<i64: 128, 8>}, {pipeline_mode = #tpu.pipeline_mode<synchronous>, transform_indices = @transform_4, window_bounds = array<i64: 1, 8>}, {pipeline_mode = #tpu.pipeline_mode<synchronous>, transform_indices = @transform_5, window_bounds = array<i64: 1, 8>}, {transform_indices = @transform_6, window_bounds = array<i64: 128, 8>}]} {
    %c0 = arith.constant 0 : index
    %c0_0 = arith.constant 0 : index
    %0 = vector.load %arg1[%c0, %c0_0] : memref<128x32xf32, #tpu.memory_space<vmem>>, vector<128x32xf32>
    %c0_1 = arith.constant 0 : index
    %c0_2 = arith.constant 0 : index
    %1 = vector.load %arg2[%c0_1, %c0_2] : memref<32x128xf32, #tpu.memory_space<vmem>>, vector<32x128xf32>
    %cst = arith.constant dense<0.000000e+00> : vector<128x128xf32>
    %2 = tpu.matmul %0, %1, %cst {dimension_numbers = #tpu.dot_dimension_numbers<[1], [0], [0], [1], [0, 0, 1, 1], [], []>} : vector<128x32xf32>, vector<32x128xf32>, vector<128x128xf32> -> vector<128x128xf32>
    %c0_3 = arith.constant 0 : index
    %c0_4 = arith.constant 0 : index
    %3 = vector.load %arg3[%c0_3, %c0_4] : memref<1x128xf32, #tpu.memory_space<vmem>>, vector<1x128xf32>
    %4 = vector.broadcast %3 : vector<1x128xf32> to vector<128x128xf32>
    %5 = arith.addf %2, %4 : vector<128x128xf32>
    %cst_5 = arith.constant 0.000000e+00 : f32
    %6 = vector.broadcast %cst_5 : f32 to vector<128x128xf32>
    %7 = arith.maximumf %5, %6 : vector<128x128xf32>
    %c0_6 = arith.constant 0 : index
    %c0_7 = arith.constant 0 : index
    %8 = vector.load %arg4[%c0_6, %c0_7] : memref<128x8xf32, #tpu.memory_space<vmem>>, vector<128x8xf32>
    %cst_8 = arith.constant dense<0.000000e+00> : vector<128x8xf32>
    %9 = tpu.matmul %7, %8, %cst_8 {dimension_numbers = #tpu.dot_dimension_numbers<[1], [0], [0], [1], [0, 0, 1, 1], [], []>} : vector<128x128xf32>, vector<128x8xf32>, vector<128x8xf32> -> vector<128x8xf32>
    %c0_9 = arith.constant 0 : index
    %c0_10 = arith.constant 0 : index
    %10 = vector.load %arg5[%c0_9, %c0_10] : memref<1x8xf32, #tpu.memory_space<vmem>>, vector<1x8xf32>
    %11 = vector.broadcast %10 : vector<1x8xf32> to vector<128x8xf32>
    %12 = arith.addf %9, %11 : vector<128x8xf32>
    %13 = tpu.iota {dimensions = array<i32: 1>} : vector<128x8xi32>
    %c3_i32 = arith.constant 3 : i32
    %14 = vector.broadcast %c3_i32 : i32 to vector<128x8xi32>
    %15 = arith.cmpi slt, %13, %14 : vector<128x8xi32>
    %16 = math.tanh %12 : vector<128x8xf32>
    %c0_11 = arith.constant 0 : index
    %c0_12 = arith.constant 0 : index
    %17 = vector.load %arg6[%c0_11, %c0_12] : memref<1x8xf32, #tpu.memory_space<vmem>>, vector<1x8xf32>
    %18 = vector.broadcast %17 : vector<1x8xf32> to vector<128x8xf32>
    %19 = arith.mulf %16, %18 : vector<128x8xf32>
    %20 = arith.select %15, %19, %12 : vector<128x8xi1>, vector<128x8xf32>
    %c0_13 = arith.constant 0 : index
    %c0_14 = arith.constant 0 : index
    %21 = vector.load %arg7[%c0_13, %c0_14] : memref<128x8xf32, #tpu.memory_space<vmem>>, vector<128x8xf32>
    tpu.vector_store %arg7[%c0_13, %c0_14], %20 {strides = array<i32>} : memref<128x8xf32, #tpu.memory_space<vmem>>, vector<128x8xf32>,
    return
  }
  func.func @transform_0(%arg0: i32) -> (i32, i32) {
    %c0_i32 = arith.constant 0 : i32
    %c0_i32_0 = arith.constant 0 : i32
    return %arg0, %c0_i32 : i32, i32
  }
  func.func @transform_1(%arg0: i32) -> (i32, i32) {
    %c0_i32 = arith.constant 0 : i32
    %c0_i32_0 = arith.constant 0 : i32
    %c0_i32_1 = arith.constant 0 : i32
    return %c0_i32, %c0_i32_0 : i32, i32
  }
  func.func @transform_2(%arg0: i32) -> (i32, i32) {
    %c0_i32 = arith.constant 0 : i32
    %c0_i32_0 = arith.constant 0 : i32
    %c0_i32_1 = arith.constant 0 : i32
    return %c0_i32, %c0_i32_0 : i32, i32
  }
  func.func @transform_3(%arg0: i32) -> (i32, i32) {
    %c0_i32 = arith.constant 0 : i32
    %c0_i32_0 = arith.constant 0 : i32
    %c0_i32_1 = arith.constant 0 : i32
    return %c0_i32, %c0_i32_0 : i32, i32
  }
  func.func @transform_4(%arg0: i32) -> (i32, i32) {
    %c0_i32 = arith.constant 0 : i32
    %c0_i32_0 = arith.constant 0 : i32
    %c0_i32_1 = arith.constant 0 : i32
    return %c0_i32, %c0_i32_0 : i32, i32
  }
  func.func @transform_5(%arg0: i32) -> (i32, i32) {
    %c0_i32 = arith.constant 0 : i32
    %c0_i32_0 = arith.constant 0 : i32
    %c0_i32_1 = arith.constant 0 : i32
    return %c0_i32, %c0_i32_0 : i32, i32
  }
  func.func @transform_6(%arg0: i32) -> (i32, i32) {
    %c0_i32 = arith.constant 0 : i32
    %c0_i32_0 = arith.constant 0 : i32
    return %arg0, %c0_i32 : i32, i32
  }
}

</mosaic_0001>

<llo_original>
// kernel: tpu_custom_call.1
$region0: #{tpu_custom_call.1}
  #allocation0 [shape = 'u32[]', space=smem, size = 0x4, offset = 0x4, fixed_abs, tag = 'smem constant byte address 0x4 - core index']
  #allocation1 [shape = 'u32[72,128]{1,0:T(1,128)}', space=vmem, size = 0x9000, scoped, tag = 'internal scratch']
  %s0 = inlined_call_operand.vmem [shape: f32[128,32], index: 0, kind: input, shape index: {}]
  %s1 = inlined_call_operand.vmem [shape: f32[32,128], index: 1, kind: input, shape index: {}]
  %s2 = inlined_call_operand.vmem [shape: f32[1,128], index: 2, kind: input, shape index: {}]
  %s3 = inlined_call_operand.vmem [shape: f32[128,8], index: 3, kind: input, shape index: {}]
  %s4 = inlined_call_operand.vmem [shape: f32[1,8], index: 4, kind: input, shape index: {}]
  %s5 = inlined_call_operand.vmem [shape: f32[1,8], index: 5, kind: input, shape index: {}]
  %s6 = inlined_call_operand.vmem [shape: f32[128,8], index: 6, kind: output, shape index: {}]
  %s7 = sld [smem:[#allocation0]]
  $region34: #{tpu_custom_call.1} parent=0
    _
  %s9 = ssub.s32 1, %s7
  %s10 = scalar_select 0, %s9, %s7
  // Predicated region
  $region2: #{tpu_custom_call.1} parent=0 // pred_check
    _
  $region3: #{tpu_custom_call.1} parent=0 // pred_check_branch
    %12 = sbr.rel (0) target = $region5
  $region4: #{tpu_custom_call.1} parent=0 // pred_region
    _
  $region5: #{tpu_custom_call.1} parent=0 // pred_fallthru
    _
  // Predicated region
  $region6: #{tpu_custom_call.1} parent=0 // pred_check
    _
  $region7: #{tpu_custom_call.1} parent=0 // pred_check_branch
    %14 = sbr.rel (0) target = $region9
  $region8: #{tpu_custom_call.1} parent=0 // pred_region
    _
  $region9: #{tpu_custom_call.1} parent=0 // pred_fallthru
    _
  // Predicated region
  $region10: #{tpu_custom_call.1} parent=0 // pred_check
    _
  $region11: #{tpu_custom_call.1} parent=0 // pred_check_branch
    %16 = sbr.rel (0) target = $region13
  $region12: #{tpu_custom_call.1} parent=0 // pred_region
    _
  $region13: #{tpu_custom_call.1} parent=0 // pred_fallthru
    _
  // Predicated region
  $region14: #{tpu_custom_call.1} parent=0 // pred_check
    _
  $region15: #{tpu_custom_call.1} parent=0 // pred_check_branch
    %18 = sbr.rel (0) target = $region17
  $region16: #{tpu_custom_call.1} parent=0 // pred_region
    _
  $region17: #{tpu_custom_call.1} parent=0 // pred_fallthru
    _
  // Predicated region
  $region18: #{tpu_custom_call.1} parent=0 // pred_check
    _
  $region19: #{tpu_custom_call.1} parent=0 // pred_check_branch
    %20 = sbr.rel (0) target = $region21
  $region20: #{tpu_custom_call.1} parent=0 // pred_region
    _
  $region21: #{tpu_custom_call.1} parent=0 // pred_fallthru
    _
  // Predicated region
  $region22: #{tpu_custom_call.1} parent=0 // pred_check
    _
  $region23: #{tpu_custom_call.1} parent=0 // pred_check_branch
    %22 = sbr.rel (0) target = $region25
  $region24: #{tpu_custom_call.1} parent=0 // pred_region
    _
  $region25: #{tpu_custom_call.1} parent=0 // pred_fallthru
    _
  %v23 = vld [vmem:[%s0] sm:$0xff]
  %v24 = vld [vmem:[%s0 + $0x8] sm:$0xff]
  %v25 = vld [vmem:[%s0 + $0x10] sm:$0xff]
  %v26 = vld [vmem:[%s0 + $0x18] sm:$0xff]
  %v27 = vld [vmem:[%s0 + $0x20] sm:$0xff]
  %v28 = vld [vmem:[%s0 + $0x28] sm:$0xff]
  %v29 = vld [vmem:[%s0 + $0x30] sm:$0xff]
  %v30 = vld [vmem:[%s0 + $0x38] sm:$0xff]
  %v31 = vld [vmem:[%s0 + $0x40] sm:$0xff]
  %v32 = vld [vmem:[%s0 + $0x48] sm:$0xff]
  %v33 = vld [vmem:[%s0 + $0x50] sm:$0xff]
  %v34 = vld [vmem:[%s0 + $0x58] sm:$0xff]
  %v35 = vld [vmem:[%s0 + $0x60] sm:$0xff]
  %v36 = vld [vmem:[%s0 + $0x68] sm:$0xff]
  %v37 = vld [vmem:[%s0 + $0x70] sm:$0xff]
  %v38 = vld [vmem:[%s0 + $0x78] sm:$0xff]
  %v39 = vld [vmem:[%s1] sm:$0xff]
  %v40 = vld [vmem:[%s1 + $0x8] sm:$0xff]
  %v41 = vld [vmem:[%s1 + $0x10] sm:$0xff]
  %v42 = vld [vmem:[%s1 + $0x18] sm:$0xff]
  %v43 = vld [vmem:[%s2] sm:$0x1]
  %v45 = vperm.slane %v43, 0
  %vm47 = vcmask 261120
  %v49 = vsel %vm47, %v23, 0
  %v52 = vsel %vm47, %v24, 0
  %v55 = vsel %vm47, %v25, 0
  %v58 = vsel %vm47, %v26, 0
  %v61 = vsel %vm47, %v27, 0
  %v64 = vsel %vm47, %v28, 0
  %v67 = vsel %vm47, %v29, 0
  %v70 = vsel %vm47, %v30, 0
  %v73 = vsel %vm47, %v31, 0
  %v76 = vsel %vm47, %v32, 0
  %v79 = vsel %vm47, %v33, 0
  %v82 = vsel %vm47, %v34, 0
  %v85 = vsel %vm47, %v35, 0
  %v88 = vsel %vm47, %v36, 0
  %v91 = vsel %vm47, %v37, 0
  %v94 = vsel %vm47, %v38, 0
  %96 = vmatpush.msra.mxu0 0.0
  %97 = vmatpush.msra.mxu0 0.0
  %98 = vmatpush.msra.mxu0 0.0
  %99 = vmatpush.msra.mxu0 0.0
  %100 = vmatpush.msra.mxu0 0.0
  %101 = vmatpush.msra.mxu0 0.0
  %102 = vmatpush.msra.mxu0 0.0
  %103 = vmatpush.msra.mxu0 0.0
  %104 = vmatpush.msra.mxu0 0.0
  %105 = vmatpush.msra.mxu0 0.0
  %106 = vmatpush.msra.mxu0 0.0
  %107 = vmatpush.msra.mxu0 0.0
  %108 = vmatpush.msra.mxu0 %v42
  %109 = vmatpush.msra.mxu0 %v41
  %110 = vmatpush.msra.mxu0 %v40
  %111 = vmatpush.msra.mxu0 %v39
  %112 = vmatmul.f32.gmra.mxu0 %v49
  %v113 = vpop.f32.mrf.mxu0
  %v114 = vadd.f32 %v45, %v113
  %115 = vmatmul.f32.gmra.mxu0 %v52
  %v116 = vpop.f32.mrf.mxu0
  %v117 = vadd.f32 %v45, %v116
  %118 = vmatmul.f32.gmra.mxu0 %v55
  %v119 = vpop.f32.mrf.mxu0
  %v120 = vadd.f32 %v45, %v119
  %121 = vmatmul.f32.gmra.mxu0 %v58
  %v122 = vpop.f32.mrf.mxu0
  %v123 = vadd.f32 %v45, %v122
  %124 = vmatmul.f32.gmra.mxu0 %v61
  %v125 = vpop.f32.mrf.mxu0
  %v126 = vadd.f32 %v45, %v125
  %127 = vmatmul.f32.gmra.mxu0 %v64
  %v128 = vpop.f32.mrf.mxu0
  %v129 = vadd.f32 %v45, %v128
  %130 = vmatmul.f32.gmra.mxu0 %v67
  %v131 = vpop.f32.mrf.mxu0
  %v132 = vadd.f32 %v45, %v131
  %133 = vmatmul.f32.gmra.mxu0 %v70
  %v134 = vpop.f32.mrf.mxu0
  %v135 = vadd.f32 %v45, %v134
  %136 = vmatmul.f32.gmra.mxu0 %v73
  %v137 = vpop.f32.mrf.mxu0
  %v138 = vadd.f32 %v45, %v137
  %139 = vmatmul.f32.gmra.mxu0 %v76
  %v140 = vpop.f32.mrf.mxu0
  %v141 = vadd.f32 %v45, %v140
  %142 = vmatmul.f32.gmra.mxu0 %v79
  %v143 = vpop.f32.mrf.mxu0
  %v144 = vadd.f32 %v45, %v143
  %145 = vmatmul.f32.gmra.mxu0 %v82
  %v146 = vpop.f32.mrf.mxu0
  %v147 = vadd.f32 %v45, %v146
  %148 = vmatmul.f32.gmra.mxu0 %v85
  %v149 = vpop.f32.mrf.mxu0
  %v150 = vadd.f32 %v45, %v149
  %151 = vmatmul.f32.gmra.mxu0 %v88
  %v152 = vpop.f32.mrf.mxu0
  %v153 = vadd.f32 %v45, %v152
  %154 = vmatmul.f32.gmra.mxu0 %v91
  %v155 = vpop.f32.mrf.mxu0
  %v156 = vadd.f32 %v45, %v155
  %157 = vmatmul.f32.gmra.mxu0 %v94
  %v158 = vpop.f32.mrf.mxu0
  %v159 = vadd.f32 %v45, %v158
  %160 = vdwg.mxu0
  %v161 = vmax.f32 %v114, 0.0
  %v162 = vmax.f32 %v117, 0.0
  %v163 = vmax.f32 %v120, 0.0
  %v164 = vmax.f32 %v123, 0.0
  %v165 = vmax.f32 %v126, 0.0
  %v166 = vmax.f32 %v129, 0.0
  %v167 = vmax.f32 %v132, 0.0
  %v168 = vmax.f32 %v135, 0.0
  %v169 = vmax.f32 %v138, 0.0
  %v170 = vmax.f32 %v141, 0.0
  %v171 = vmax.f32 %v144, 0.0
  %v172 = vmax.f32 %v147, 0.0
  %v173 = vmax.f32 %v150, 0.0
  %v174 = vmax.f32 %v153, 0.0
  %v175 = vmax.f32 %v156, 0.0
  %v176 = vmax.f32 %v159, 0.0
  %v177 = vld [vmem:[%s3] sm:$0xff]
  %v178 = vld [vmem:[%s3 + $0x8] sm:$0xff]
  %v179 = vld [vmem:[%s3 + $0x10] sm:$0xff]
  %v180 = vld [vmem:[%s3 + $0x18] sm:$0xff]
  %v181 = vld [vmem:[%s3 + $0x20] sm:$0xff]
  %v182 = vld [vmem:[%s3 + $0x28] sm:$0xff]
  %v183 = vld [vmem:[%s3 + $0x30] sm:$0xff]
  %v184 = vld [vmem:[%s3 + $0x38] sm:$0xff]
  %v185 = vld [vmem:[%s3 + $0x40] sm:$0xff]
  %v186 = vld [vmem:[%s3 + $0x48] sm:$0xff]
  %v187 = vld [vmem:[%s3 + $0x50] sm:$0xff]
  %v188 = vld [vmem:[%s3 + $0x58] sm:$0xff]
  %v189 = vld [vmem:[%s3 + $0x60] sm:$0xff]
  %v190 = vld [vmem:[%s3 + $0x68] sm:$0xff]
  %v191 = vld [vmem:[%s3 + $0x70] sm:$0xff]
  %v192 = vld [vmem:[%s3 + $0x78] sm:$0xff]
  %v193 = vld [vmem:[%s4] sm:$0x1]
  %v195 = vperm.slane %v193, 0
  %197 = vmatpush.msra.mxu0 %v192
  %198 = vmatpush.msra.mxu0 %v191
  %199 = vmatpush.msra.mxu0 %v190
  %200 = vmatpush.msra.mxu0 %v189
  %201 = vmatpush.msra.mxu0 %v188
  %202 = vmatpush.msra.mxu0 %v187
  %203 = vmatpush.msra.mxu0 %v186
  %204 = vmatpush.msra.mxu0 %v185
  %205 = vmatpush.msra.mxu0 %v184
  %206 = vmatpush.msra.mxu0 %v183
  %207 = vmatpush.msra.mxu0 %v182
  %208 = vmatpush.msra.mxu0 %v181
  %209 = vmatpush.msra.mxu0 %v180
  %210 = vmatpush.msra.mxu0 %v179
  %211 = vmatpush.msra.mxu0 %v178
  %212 = vmatpush.msra.mxu0 %v177
  %213 = vmatmul.f32.gmra.mxu0 %v161
  %v214 = vpop.f32.mrf.mxu0
  %v215 = vadd.f32 %v195, %v214
  %216 = vmatmul.f32.gmra.mxu0 %v162
  %v217 = vpop.f32.mrf.mxu0
  %v218 = vadd.f32 %v195, %v217
  %219 = vmatmul.f32.gmra.mxu0 %v163
  %v220 = vpop.f32.mrf.mxu0
  %v221 = vadd.f32 %v195, %v220
  %222 = vmatmul.f32.gmra.mxu0 %v164
  %v223 = vpop.f32.mrf.mxu0
  %v224 = vadd.f32 %v195, %v223
  %225 = vmatmul.f32.gmra.mxu0 %v165
  %v226 = vpop.f32.mrf.mxu0
  %v227 = vadd.f32 %v195, %v226
  %228 = vmatmul.f32.gmra.mxu0 %v166
  %v229 = vpop.f32.mrf.mxu0
  %v230 = vadd.f32 %v195, %v229
  %231 = vmatmul.f32.gmra.mxu0 %v167
  %v232 = vpop.f32.mrf.mxu0
  %v233 = vadd.f32 %v195, %v232
  %234 = vmatmul.f32.gmra.mxu0 %v168
  %v235 = vpop.f32.mrf.mxu0
  %v236 = vadd.f32 %v195, %v235
  %237 = vmatmul.f32.gmra.mxu0 %v169
  %v238 = vpop.f32.mrf.mxu0
  %v239 = vadd.f32 %v195, %v238
  %240 = vmatmul.f32.gmra.mxu0 %v170
  %v241 = vpop.f32.mrf.mxu0
  %v242 = vadd.f32 %v195, %v241
  %243 = vmatmul.f32.gmra.mxu0 %v171
  %v244 = vpop.f32.mrf.mxu0
  %v245 = vadd.f32 %v195, %v244
  %246 = vmatmul.f32.gmra.mxu0 %v172
  %v247 = vpop.f32.mrf.mxu0
  %v248 = vadd.f32 %v195, %v247
  %249 = vmatmul.f32.gmra.mxu0 %v173
  %v250 = vpop.f32.mrf.mxu0
  %v251 = vadd.f32 %v195, %v250
  %252 = vmatmul.f32.gmra.mxu0 %v174
  %v253 = vpop.f32.mrf.mxu0
  %v254 = vadd.f32 %v195, %v253
  %255 = vmatmul.f32.gmra.mxu0 %v175
  %v256 = vpop.f32.mrf.mxu0
  %v257 = vadd.f32 %v195, %v256
  %258 = vmatmul.f32.gmra.mxu0 %v176
  %v259 = vpop.f32.mrf.mxu0
  %v260 = vadd.f32 %v195, %v259
  %261 = vdwg.mxu0
  %v262 = vlaneseq
  %v263 = vand.u32 %v262, 127
  %vm264 = vcmp.lt.s32.totalorder %v263, 3
  %v265 = vtanh.pop %v215
  %v266 = vtanh.pop %v218
  %v267 = vtanh.pop %v221
  %v268 = vtanh.pop %v224
  %v269 = vtanh.pop %v227
  %v270 = vtanh.pop %v230
  %v271 = vtanh.pop %v233
  %v272 = vtanh.pop %v236
  %v273 = vtanh.pop %v239
  %v274 = vtanh.pop %v242
  %v275 = vtanh.pop %v245
  %v276 = vtanh.pop %v248
  %v277 = vtanh.pop %v251
  %v278 = vtanh.pop %v254
  %v279 = vtanh.pop %v257
  %v280 = vtanh.pop %v260
  %v281 = vld [vmem:[%s5] sm:$0x1]
  %v283 = vperm.slane %v281, 0
  %v285 = vmul.f32 %v265, %v283
  %v286 = vmul.f32 %v266, %v283
  %v287 = vmul.f32 %v267, %v283
  %v288 = vmul.f32 %v268, %v283
  %v289 = vmul.f32 %v269, %v283
  %v290 = vmul.f32 %v270, %v283
  %v291 = vmul.f32 %v271, %v283
  %v292 = vmul.f32 %v272, %v283
  %v293 = vmul.f32 %v273, %v283
  %v294 = vmul.f32 %v274, %v283
  %v295 = vmul.f32 %v275, %v283
  %v296 = vmul.f32 %v276, %v283
  %v297 = vmul.f32 %v277, %v283
  %v298 = vmul.f32 %v278, %v283
  %v299 = vmul.f32 %v279, %v283
  %v300 = vmul.f32 %v280, %v283
  %v301 = vsel %vm264, %v285, %v215
  %v302 = vsel %vm264, %v286, %v218
  %v303 = vsel %vm264, %v287, %v221
  %v304 = vsel %vm264, %v288, %v224
  %v305 = vsel %vm264, %v289, %v227
  %v306 = vsel %vm264, %v290, %v230
  %v307 = vsel %vm264, %v291, %v233
  %v308 = vsel %vm264, %v292, %v236
  %v309 = vsel %vm264, %v293, %v239
  %v310 = vsel %vm264, %v294, %v242
  %v311 = vsel %vm264, %v295, %v245
  %v312 = vsel %vm264, %v296, %v248
  %v313 = vsel %vm264, %v297, %v251
  %v314 = vsel %vm264, %v298, %v254
  %v315 = vsel %vm264, %v299, %v257
  %v316 = vsel %vm264, %v300, %v260
  %vm317 = vcmask 64512
  %318 = vst.msk [vmem:[%s6] sm:$0xff] %vm317, %v301
  %319 = vst.msk [vmem:[%s6 + $0x8] sm:$0xff] %vm317, %v302
  %320 = vst.msk [vmem:[%s6 + $0x10] sm:$0xff] %vm317, %v303
  %321 = vst.msk [vmem:[%s6 + $0x18] sm:$0xff] %vm317, %v304
  %322 = vst.msk [vmem:[%s6 + $0x20] sm:$0xff] %vm317, %v305
  %323 = vst.msk [vmem:[%s6 + $0x28] sm:$0xff] %vm317, %v306
  %324 = vst.msk [vmem:[%s6 + $0x30] sm:$0xff] %vm317, %v307
  %325 = vst.msk [vmem:[%s6 + $0x38] sm:$0xff] %vm317, %v308
  %326 = vst.msk [vmem:[%s6 + $0x40] sm:$0xff] %vm317, %v309
  %327 = vst.msk [vmem:[%s6 + $0x48] sm:$0xff] %vm317, %v310
  %328 = vst.msk [vmem:[%s6 + $0x50] sm:$0xff] %vm317, %v311
  %329 = vst.msk [vmem:[%s6 + $0x58] sm:$0xff] %vm317, %v312
  %330 = vst.msk [vmem:[%s6 + $0x60] sm:$0xff] %vm317, %v313
  %331 = vst.msk [vmem:[%s6 + $0x68] sm:$0xff] %vm317, %v314
  %332 = vst.msk [vmem:[%s6 + $0x70] sm:$0xff] %vm317, %v315
  %333 = vst.msk [vmem:[%s6 + $0x78] sm:$0xff] %vm317, %v316
  // Predicated region
  $region26: #{tpu_custom_call.1} parent=0 // pred_check
    _
  $region27: #{tpu_custom_call.1} parent=0 // pred_check_branch
    %335 = sbr.rel (0) target = $region29
  $region28: #{tpu_custom_call.1} parent=0 // pred_region
    _
  $region29: #{tpu_custom_call.1} parent=0 // pred_fallthru
    _
  // Predicated region
  $region30: #{tpu_custom_call.1} parent=0 // pred_check
    _
  $region31: #{tpu_custom_call.1} parent=0 // pred_check_branch
    %337 = sbr.rel (0) target = $region33
  $region32: #{tpu_custom_call.1} parent=0 // pred_region
    _
  $region33: #{tpu_custom_call.1} parent=0 // pred_fallthru
    _

</llo_original>
